<compile_context>
chip_gen: v7x
topology: tpu7x:2x2x1
jax: 0.10.0
libtpu: 0.0.40
codegen_flags: <defaults>
</compile_context>

<pallas_src>
import functools

import numpy as np
import jax
import jax.numpy as jnp
from jax.experimental import pallas as pl
from jax.experimental.pallas import tpu as pltpu

_LANE = 128        # vreg lane width
_NEG = -1e30       # plain Python float ("-inf" for padded-class masking);
                   # must NOT be a jnp scalar or it becomes a captured const.


def _round_up(n: int, m: int) -> int:
    return ((n + m - 1) // m) * m


def _pad2d(a, shape, dtype):
    a = jnp.asarray(a, dtype=dtype)
    return jnp.pad(a, [(0, shape[0] - a.shape[0]), (0, shape[1] - a.shape[1])])


# ---------------- fused kernel bodies ----------------

def _gcn_tail(adj, s1, b1, w2, b2, h_transform, nclass):
    """Everything after s1 = x @ W1.

    adj / s1 / w2 are bf16 (MXU operands); accumulation and all elementwise
    work (bias, ReLU, dropout, log_softmax) happen in f32.
    """
    # layer 1 aggregate: h = relu(adj @ s1 + b1)
    h = jnp.maximum(jnp.dot(adj, s1, preferred_element_type=jnp.float32) + b1, 0.0)
    h = h_transform(h)                               # identity (eval) / inverted dropout

    # layer 2: z = adj @ (h @ W2) + b2
    s2 = jnp.dot(h.astype(jnp.bfloat16), w2, preferred_element_type=jnp.float32)
    z = jnp.dot(adj, s2.astype(jnp.bfloat16), preferred_element_type=jnp.float32) + b2

    # mask padded class columns so log_softmax normalizes over real classes only
    col = jax.lax.broadcasted_iota(jnp.int32, z.shape, 1)
    z = jnp.where(col < nclass, z, _NEG)

    # log_softmax over dim=1 (exp/log -> EUP slot, row reductions -> XLU slot)
    m = jnp.max(z, axis=1, keepdims=True)
    shifted = z - m
    lse = jnp.log(jnp.sum(jnp.exp(shifted), axis=1, keepdims=True))
    return shifted - lse


def gcn_fused_eval_kernel(x_ref, adj_hbm, w1_ref, b1_ref, w2_ref, b2_ref,
                          out_ref, adj_vmem, adj_sem, *, nclass):
    # Overlap the (large) adjacency HBM->VMEM DMA with the adj-independent x @ W1.
    cp = pltpu.make_async_copy(adj_hbm, adj_vmem, adj_sem)
    cp.start()
    s1 = jnp.dot(x_ref[...], w1_ref[...],
                 preferred_element_type=jnp.float32).astype(jnp.bfloat16)
    b1, w2, b2 = b1_ref[...], w2_ref[...], b2_ref[...]
    cp.wait()
    out_ref[...] = _gcn_tail(adj_vmem[...], s1, b1, w2, b2, lambda h: h, nclass)


def gcn_fused_train_kernel(seed_ref, x_ref, adj_hbm, w1_ref, b1_ref, w2_ref,
                           b2_ref, out_ref, adj_vmem, adj_sem, *,
                           nclass, keep_threshold, inv_keep):
    cp = pltpu.make_async_copy(adj_hbm, adj_vmem, adj_sem)
    cp.start()
    pltpu.prng_seed(seed_ref[0])
    s1 = jnp.dot(x_ref[...], w1_ref[...],
                 preferred_element_type=jnp.float32).astype(jnp.bfloat16)
    b1, w2, b2 = b1_ref[...], w2_ref[...], b2_ref[...]
    cp.wait()

    def dropout(h):
        # Inverted dropout: keep element iff raw uint32 bits >= round(p * 2^32).
        # One uint32 compare on the VALU; no shift / int->float convert / mul.
        bits = pltpu.bitcast(pltpu.prng_random_bits(h.shape), jnp.uint32)
        keep = bits >= np.uint32(keep_threshold)
        return jnp.where(keep, h * inv_keep, 0.0)

    out_ref[...] = _gcn_tail(adj_vmem[...], s1, b1, w2, b2, dropout, nclass)


# ---------------- pallas_call plumbing ----------------

def _vmem_limit_bytes(n_p, f_p, h_p, c_p):
    bf16, f32 = 2, 4
    resident = (n_p * n_p * bf16                       # adj VMEM scratch (single copy)
                + n_p * f_p * bf16                     # x
                + (f_p * h_p + h_p * c_p) * bf16       # W1, W2
                + (h_p + c_p) * f32                    # biases
                + n_p * c_p * f32)                     # output
    # s1 / h / s2 / z + softmax temporaries the elementwise tail materializes
    temporaries = n_p * (2 * h_p + 2 * c_p + 8 * _LANE) * f32
    budget = int((resident + temporaries) * 1.25) + (8 << 20)
    # Cap below physical VMEM (128 MiB v5e/v6e; only 64 MiB/TC on v7x — larger
    # graphs need the row-panel streaming TODO above anyway).
    return min(max(budget, 32 << 20), 100 << 20)


def _cost_estimate(n_p, f_p, h_p, c_p):
    flops = 2 * n_p * (f_p * h_p + n_p * h_p + h_p * c_p + n_p * c_p)
    bytes_accessed = (2 * (n_p * n_p + n_p * f_p + f_p * h_p + h_p * c_p)
                      + 4 * (h_p + c_p + n_p * c_p))
    return pl.CostEstimate(flops=flops,
                           transcendentals=n_p * c_p + n_p,
                           bytes_accessed=bytes_accessed)


def _build_call(n_p, f_p, h_p, c_p, kernel, with_seed):
    vmem = pl.BlockSpec(memory_space=pltpu.MemorySpace.VMEM)
    hbm = pl.BlockSpec(memory_space=pl.ANY)            # adj stays in HBM; manual DMA
    smem = pl.BlockSpec(memory_space=pltpu.MemorySpace.SMEM)
    in_specs = ([smem] if with_seed else []) + [vmem, hbm, vmem, vmem, vmem, vmem]
    return pl.pallas_call(
        kernel,
        out_shape=jax.ShapeDtypeStruct((n_p, c_p), jnp.float32),
        in_specs=in_specs,
        out_specs=vmem,
        scratch_shapes=[pltpu.VMEM((n_p, n_p), jnp.bfloat16),
                        pltpu.SemaphoreType.DMA],
        compiler_params=pltpu.CompilerParams(
            vmem_limit_bytes=_vmem_limit_bytes(n_p, f_p, h_p, c_p)),
        cost_estimate=_cost_estimate(n_p, f_p, h_p, c_p),
    )


# ---------------- host-side preparation (hoist out of the training loop) ----------------

def prepare_graph(x, adj):
    """Pad + cast the graph ONCE per graph (not per forward call)."""
    n, nfeat = x.shape
    assert adj.shape == (n, n)
    n_p = _round_up(n, _LANE)        # N is a lane dim of adj -> keep it lane-dense
    f_p = _round_up(nfeat, _LANE)
    x_p = _pad2d(x, (n_p, f_p), jnp.bfloat16)
    adj_p = _pad2d(adj, (n_p, n_p), jnp.bfloat16)
    return x_p, adj_p


def prepare_params(params):
    """Pad + cast weights ONCE (biases stay f32)."""
    nfeat, nhid = params["w1"].shape
    nclass = params["w2"].shape[1]
    f_p = _round_up(nfeat, _LANE)
    h_p = _round_up(nhid, _LANE)
    c_p = _round_up(nclass, _LANE)
    return {
        "w1": _pad2d(params["w1"], (f_p, h_p), jnp.bfloat16),
        "w2": _pad2d(params["w2"], (h_p, c_p), jnp.bfloat16),
        "b1": _pad2d(params["b1"].reshape(1, -1), (1, h_p), jnp.float32),
        "b2": _pad2d(params["b2"].reshape(1, -1), (1, c_p), jnp.float32),
    }


@functools.partial(jax.jit, static_argnames=("nclass", "dropout_p", "training"))
def gcn_forward_padded(x_p, adj_p, w1_p, b1_p, w2_p, b2_p, seed, *,
                       nclass, dropout_p=0.5, training=False):
    n_p, f_p = x_p.shape
    h_p = w1_p.shape[1]
    c_p = w2_p.shape[1]

    if training and dropout_p > 0.0:
        keep_threshold = min(int(round(float(dropout_p) * 2**32)), 2**32 - 1)
        kernel = functools.partial(gcn_fused_train_kernel, nclass=nclass,
                                   keep_threshold=keep_threshold,
                                   inv_keep=1.0 / (1.0 - float(dropout_p)))
        call = _build_call(n_p, f_p, h_p, c_p, kernel, with_seed=True)
        seed_arr = jnp.reshape(jnp.asarray(seed, dtype=jnp.int32), (1,))
        return call(seed_arr, x_p, adj_p, w1_p, b1_p, w2_p, b2_p)

    kernel = functools.partial(gcn_fused_eval_kernel, nclass=nclass)
    call = _build_call(n_p, f_p, h_p, c_p, kernel, with_seed=False)
    return call(x_p, adj_p, w1_p, b1_p, w2_p, b2_p)


def gcn_forward(x, adj, params, dropout_p=0.5, training=False, seed=0):
    """Convenience wrapper. In a training loop, call prepare_graph/prepare_params
    once and reuse their outputs with gcn_forward_padded directly."""
    n = x.shape[0]
    nclass = params["w2"].shape[1]
    x_p, adj_p = prepare_graph(x, adj)
    pp = prepare_params(params)
    out_p = gcn_forward_padded(x_p, adj_p, pp["w1"], pp["b1"], pp["w2"], pp["b2"],
                               seed, nclass=nclass, dropout_p=float(dropout_p),
                               training=bool(training))
    return out_p[:n, :nclass]


def init_params(key, nfeat, nhid, nclass):
    # Matches GraphConvolutionLayer init: weight [in, out], bias [out],
    # uniform(-stdv, stdv), stdv = 1/sqrt(out).
    k1, k2, k3, k4 = jax.random.split(key, 4)
    s1 = 1.0 / float(np.sqrt(nhid))
    s2 = 1.0 / float(np.sqrt(nclass))
    return {
        "w1": jax.random.uniform(k1, (nfeat, nhid), jnp.float32, -s1, s1),
        "b1": jax.random.uniform(k2, (nhid,), jnp.float32, -s1, s1),
        "w2": jax.random.uniform(k3, (nhid, nclass), jnp.float32, -s2, s2),
        "b2": jax.random.uniform(k4, (nclass,), jnp.float32, -s2, s2),
    }


if __name__ == "__main__":
    key = jax.random.PRNGKey(0)
    N, nfeat, nhid, nclass = 16, 32, 16, 8

    kx, ka, kp = jax.random.split(key, 3)
    x = jax.random.normal(kx, (N, nfeat), jnp.float32)

    # Symmetric, row-normalized dense adjacency with self-loops.
    a = (jax.random.uniform(ka, (N, N)) > 0.7).astype(jnp.float32)
    a = jnp.maximum(a, a.T) + jnp.eye(N, dtype=jnp.float32)
    adj = a / jnp.sum(a, axis=1, keepdims=True)

    params = init_params(kp, nfeat, nhid, nclass)

    out = gcn_forward(x, adj, params, dropout_p=0.5, training=False)
    out = jax.block_until_ready(out)

    # Pure-JAX f32 reference (eval mode: dropout is identity).
    h_ref = jnp.maximum(adj @ (x @ params["w1"]) + params["b1"], 0.0)
    z_ref = adj @ (h_ref @ params["w2"]) + params["b2"]
    ref = jax.nn.log_softmax(z_ref, axis=1)

    assert out.shape == (N, nclass)
    assert bool(jnp.all(jnp.isfinite(out)))
    # bf16 MXU operands with f32 accumulation -> loose tolerance vs f32 reference.
    assert float(jnp.max(jnp.abs(out - ref))) < 5e-2
    # log_softmax rows must still normalize exactly over the real classes.
    assert jnp.allclose(jnp.sum(jnp.exp(out), axis=1), 1.0, atol=1e-3)

    print("KERNEL_OK")
</pallas_src>

<mosaic_0001>
module attributes {stable_mosaic.version = 11 : i64} {
  func.func @gcn_fused_eval_kernel(%arg0: memref<128x128xbf16, #tpu.memory_space<vmem>>, %arg1: memref<128x128xbf16, #tpu.memory_space<any>>, %arg2: memref<128x128xbf16, #tpu.memory_space<vmem>>, %arg3: memref<1x128xf32, #tpu.memory_space<vmem>>, %arg4: memref<128x128xbf16, #tpu.memory_space<vmem>>, %arg5: memref<1x128xf32, #tpu.memory_space<vmem>>, %arg6: memref<128x128xf32, #tpu.memory_space<vmem>>, %arg7: memref<128x128xbf16, #tpu.memory_space<vmem>>, %arg8: memref<!tpu.dma_semaphore, #tpu.memory_space<semaphore_mem>>) attributes {dimension_semantics = [], scalar_prefetch = 0 : i64, scratch_operands = 2 : i64, tpu.core_type = #tpu.core_type<tc>} {
    tpu.enqueue_dma source(%arg1 : memref<128x128xbf16, #tpu.memory_space<any>>) target(%arg7 : memref<128x128xbf16, #tpu.memory_space<vmem>>) target_semaphore(%arg8 : memref<!tpu.dma_semaphore, #tpu.memory_space<semaphore_mem>>)
    %c0 = arith.constant 0 : index
    %c0_0 = arith.constant 0 : index
    %0 = vector.load %arg0[%c0, %c0_0] : memref<128x128xbf16, #tpu.memory_space<vmem>>, vector<128x128xbf16>
    %c0_1 = arith.constant 0 : index
    %c0_2 = arith.constant 0 : index
    %1 = vector.load %arg2[%c0_1, %c0_2] : memref<128x128xbf16, #tpu.memory_space<vmem>>, vector<128x128xbf16>
    %cst = arith.constant dense<0.000000e+00> : vector<128x128xf32>
    %2 = tpu.matmul %0, %1, %cst {dimension_numbers = #tpu.dot_dimension_numbers<[1], [0], [0], [1], [0, 0, 1, 1], [], []>} : vector<128x128xbf16>, vector<128x128xbf16>, vector<128x128xf32> -> vector<128x128xf32>
    %3 = arith.truncf %2 : vector<128x128xf32> to vector<128x128xbf16>
    %c0_3 = arith.constant 0 : index
    %c0_4 = arith.constant 0 : index
    %4 = vector.load %arg3[%c0_3, %c0_4] : memref<1x128xf32, #tpu.memory_space<vmem>>, vector<1x128xf32>
    %c0_5 = arith.constant 0 : index
    %c0_6 = arith.constant 0 : index
    %5 = vector.load %arg4[%c0_5, %c0_6] : memref<128x128xbf16, #tpu.memory_space<vmem>>, vector<128x128xbf16>
    %c0_7 = arith.constant 0 : index
    %c0_8 = arith.constant 0 : index
    %6 = vector.load %arg5[%c0_7, %c0_8] : memref<1x128xf32, #tpu.memory_space<vmem>>, vector<1x128xf32>
    tpu.wait_dma2 semaphore(%arg8 : memref<!tpu.dma_semaphore, #tpu.memory_space<semaphore_mem>>) src(%arg1 : memref<128x128xbf16, #tpu.memory_space<any>>) dst(%arg7 : memref<128x128xbf16, #tpu.memory_space<vmem>>)
    %c0_9 = arith.constant 0 : index
    %c0_10 = arith.constant 0 : index
    %7 = vector.load %arg7[%c0_9, %c0_10] : memref<128x128xbf16, #tpu.memory_space<vmem>>, vector<128x128xbf16>
    %cst_11 = arith.constant dense<0.000000e+00> : vector<128x128xf32>
    %8 = tpu.matmul %7, %3, %cst_11 {dimension_numbers = #tpu.dot_dimension_numbers<[1], [0], [0], [1], [0, 0, 1, 1], [], []>} : vector<128x128xbf16>, vector<128x128xbf16>, vector<128x128xf32> -> vector<128x128xf32>
    %9 = vector.broadcast %4 : vector<1x128xf32> to vector<128x128xf32>
    %10 = arith.addf %8, %9 : vector<128x128xf32>
    %cst_12 = arith.constant 0.000000e+00 : f32
    %11 = vector.broadcast %cst_12 : f32 to vector<128x128xf32>
    %12 = arith.maximumf %10, %11 : vector<128x128xf32>
    %13 = arith.truncf %12 : vector<128x128xf32> to vector<128x128xbf16>
    %cst_13 = arith.constant dense<0.000000e+00> : vector<128x128xf32>
    %14 = tpu.matmul %13, %5, %cst_13 {dimension_numbers = #tpu.dot_dimension_numbers<[1], [0], [0], [1], [0, 0, 1, 1], [], []>} : vector<128x128xbf16>, vector<128x128xbf16>, vector<128x128xf32> -> vector<128x128xf32>
    %15 = arith.truncf %14 : vector<128x128xf32> to vector<128x128xbf16>
    %cst_14 = arith.constant dense<0.000000e+00> : vector<128x128xf32>
    %16 = tpu.matmul %7, %15, %cst_14 {dimension_numbers = #tpu.dot_dimension_numbers<[1], [0], [0], [1], [0, 0, 1, 1], [], []>} : vector<128x128xbf16>, vector<128x128xbf16>, vector<128x128xf32> -> vector<128x128xf32>
    %17 = vector.broadcast %6 : vector<1x128xf32> to vector<128x128xf32>
    %18 = arith.addf %16, %17 : vector<128x128xf32>
    %19 = tpu.iota {dimensions = array<i32: 1>} : vector<128x128xi32>
    %c8_i32 = arith.constant 8 : i32
    %20 = vector.broadcast %c8_i32 : i32 to vector<128x128xi32>
    %21 = arith.cmpi slt, %19, %20 : vector<128x128xi32>
    %cst_15 = arith.constant -1.000000e+30 : f32
    %22 = vector.broadcast %cst_15 : f32 to vector<128x128xf32>
    %23 = arith.select %21, %18, %22 : vector<128x128xi1>, vector<128x128xf32>
    %cst_16 = arith.constant dense<0xFF800000> : vector<128xf32>
    %24 = vector.multi_reduction <maximumf>, %23, %cst_16 [1] : vector<128x128xf32> to vector<128xf32>
    %25 = vector.shape_cast %24 : vector<128xf32> to vector<128x1xf32>
    %26 = vector.broadcast %25 : vector<128x1xf32> to vector<128x128xf32>
    %27 = arith.subf %23, %26 : vector<128x128xf32>
    %28 = math.exp %27 : vector<128x128xf32>
    %cst_17 = arith.constant dense<0.000000e+00> : vector<128xf32>
    %29 = vector.multi_reduction <add>, %28, %cst_17 [1] : vector<128x128xf32> to vector<128xf32>
    %30 = vector.shape_cast %29 : vector<128xf32> to vector<128x1xf32>
    %31 = math.log %30 : vector<128x1xf32>
    %32 = vector.broadcast %31 : vector<128x1xf32> to vector<128x128xf32>
    %33 = arith.subf %27, %32 : vector<128x128xf32>
    %c0_18 = arith.constant 0 : index
    %c0_19 = arith.constant 0 : index
    %34 = vector.load %arg6[%c0_18, %c0_19] : memref<128x128xf32, #tpu.memory_space<vmem>>, vector<128x128xf32>
    tpu.vector_store %arg6[%c0_18, %c0_19], %33 {strides = array<i32>} : memref<128x128xf32, #tpu.memory_space<vmem>>, vector<128x128xf32>,
    return
  }
}

</mosaic_0001>

<llo_original>
// kernel: gcn_forward_padded.1
$region0: #{gcn_forward_padded.1}
  #allocation0 [shape = 'u32[]', space=smem, size = 0x4, offset = 0x4, fixed_abs, tag = 'smem constant byte address 0x4 - core index']
  #allocation1 [shape = 'u32[144,128]{1,0:T(1,128)}', space=vmem, size = 0x12000, scoped, tag = 'internal scratch']
  #allocation2 [shape = 'bf16[128,128]{1,0:T(16,128)(2,1)}', space=vmem, size = 0x8000, scoped, tag = 'scratch operand']
  #allocation3 [shape = 's32[1]{0}', space=sflag, size = 0x4, scoped, tag = 'scratch operand']
  #allocation11 [shape = 's32[]', space=sflag, size = 0x4, offset = 0, fixed_abs, tag = 'sflag constant byte address 0x0 - dummy sync flag']
  #allocation12 [shape = 's32[]', space=sflag, size = 0x4, offset = 0, fixed_abs, tag = 'sflag constant byte address 0x0 - dummy sync flag']
  #allocation13 [shape = 'u32[]', space=smem, size = 0x4, offset = 0x44, fixed_abs, tag = 'smem constant byte address 0x44 - assertion arg 0']
  #allocation14 [shape = 'u32[]', space=smem, size = 0x4, offset = 0x48, fixed_abs, tag = 'smem constant byte address 0x48 - assertion arg 1']
  %s0 = inlined_call_operand.hbm [shape: bf16[128,128], index: 0, kind: input, shape index: {}]
  %s1 = inlined_call_operand.hbm [shape: bf16[128,128], index: 1, kind: input, shape index: {}]
  %s2 = inlined_call_operand.hbm [shape: bf16[128,128], index: 2, kind: input, shape index: {}]
  %s3 = inlined_call_operand.vmem [shape: f32[1,128], index: 3, kind: input, shape index: {}]
  %s4 = inlined_call_operand.hbm [shape: bf16[128,128], index: 4, kind: input, shape index: {}]
  %s5 = inlined_call_operand.vmem [shape: f32[1,128], index: 5, kind: input, shape index: {}]
  %s6 = inlined_call_operand.hbm [shape: f32[128,128], index: 6, kind: output, shape index: {}]
  %s7 = sld [smem:[#allocation0]]
  $region46: #{gcn_forward_padded.1} parent=0
    _
  %s9 = ssub.s32 1, %s7
  %s10 = scalar_select 0, %s9, %s7
  $region1: #{gcn_forward_padded.1} parent=0
    #allocation4 [shape = 'u8[32768]{0}', space=vmem, size = 0x8000, scoped, tag = 'input window, operand 0, single buffered']
    #allocation5 [shape = 's32[1]{0}', space=sflag, size = 0x4, scoped, tag = 'scoped memory for gcn_forward_padded.1']
    #allocation6 [shape = 's32[1]{0}', space=sflag, size = 0x4, scoped, tag = 'scoped memory for gcn_forward_padded.1']
    #allocation7 [shape = 'u8[32768]{0}', space=vmem, size = 0x8000, scoped, tag = 'input window, operand 2, single buffered']
    #allocation8 [shape = 's32[1]{0}', space=sflag, size = 0x4, scoped, tag = 'scoped memory for gcn_forward_padded.1']
    #allocation9 [shape = 'u8[32768]{0}', space=vmem, size = 0x8000, scoped, tag = 'input window, operand 4, single buffered']
    #allocation10 [shape = 'u8[65536]{0}', space=vmem, size = 0x10000, scoped, tag = 'output window, operand 0, single buffered']
    %11 = vsyncpa [#allocation5], 0
    %12 = vsyncpa [#allocation8], 0
    %13 = vsyncpa [#allocation6], 0
    // Predicated region
    $region2: #{gcn_forward_padded.1} parent=1 // pred_check
      _
    $region3: #{gcn_forward_padded.1} parent=1 // pred_check_branch
      %15 = sbr.rel (0) target = $region5
    $region4: #{gcn_forward_padded.1} parent=1 // pred_region
      %s17 = ssub.s32 1024, 1024
      %18 = vsyncadd [#allocation5], %s17
      %s19 = sshll.u32 [#allocation4], 4
      %s20 = int_to_ptr.vmem [resolvable:$true] %s19
      %25 = dma.hbm_to_vmem [thread:$0]  %s0, 1024, %s20, [#allocation5], 64, 64, 4
    $region5: #{gcn_forward_padded.1} parent=1 // pred_fallthru
      _
    // Predicated region
    $region6: #{gcn_forward_padded.1} parent=1 // pred_check
      _
    $region7: #{gcn_forward_padded.1} parent=1 // pred_check_branch
      %27 = sbr.rel (0) target = $region9
    $region8: #{gcn_forward_padded.1} parent=1 // pred_region
      %s29 = ssub.s32 1024, 1024
      %30 = vsyncadd [#allocation8], %s29
      %s31 = sshll.u32 [#allocation7], 4
      %s32 = int_to_ptr.vmem [resolvable:$true] %s31
      %37 = dma.hbm_to_vmem [thread:$0]  %s2, 1024, %s32, [#allocation8], 64, 64, 4
    $region9: #{gcn_forward_padded.1} parent=1 // pred_fallthru
      _
    // Predicated region
    $region10: #{gcn_forward_padded.1} parent=1 // pred_check
      _
    $region11: #{gcn_forward_padded.1} parent=1 // pred_check_branch
      %39 = sbr.rel (0) target = $region13
    $region12: #{gcn_forward_padded.1} parent=1 // pred_region
      _
    $region13: #{gcn_forward_padded.1} parent=1 // pred_fallthru
      _
    // Predicated region
    $region14: #{gcn_forward_padded.1} parent=1 // pred_check
      _
    $region15: #{gcn_forward_padded.1} parent=1 // pred_check_branch
      %41 = sbr.rel (0) target = $region17
    $region16: #{gcn_forward_padded.1} parent=1 // pred_region
      %s43 = ssub.s32 1024, 1024
      %44 = vsyncadd [#allocation8], %s43
      %s45 = sshll.u32 [#allocation9], 4
      %s46 = int_to_ptr.vmem [resolvable:$true] %s45
      %51 = dma.hbm_to_vmem [thread:$0]  %s4, 1024, %s46, [#allocation8], 64, 64, 4
    $region17: #{gcn_forward_padded.1} parent=1 // pred_fallthru
      _
    // Predicated region
    $region18: #{gcn_forward_padded.1} parent=1 // pred_check
      _
    $region19: #{gcn_forward_padded.1} parent=1 // pred_check_branch
      %53 = sbr.rel (0) target = $region21
    $region20: #{gcn_forward_padded.1} parent=1 // pred_region
      _
    $region21: #{gcn_forward_padded.1} parent=1 // pred_fallthru
      _
    // Predicated region
    $region22: #{gcn_forward_padded.1} parent=1 // pred_check
      _
    $region23: #{gcn_forward_padded.1} parent=1 // pred_check_branch
      %55 = sbr.rel (0) target = $region25
    $region24: #{gcn_forward_padded.1} parent=1 // pred_region
      %56 = dma.done [#allocation5], 1024
    $region25: #{gcn_forward_padded.1} parent=1 // pred_fallthru
      _
    // Predicated region
    $region26: #{gcn_forward_padded.1} parent=1 // pred_check
      _
    $region27: #{gcn_forward_padded.1} parent=1 // pred_check_branch
      %58 = sbr.rel (0) target = $region29
    $region28: #{gcn_forward_padded.1} parent=1 // pred_region
      %59 = dma.done [#allocation8], 1024
    $region29: #{gcn_forward_padded.1} parent=1 // pred_fallthru
      _
    // Predicated region
    $region30: #{gcn_forward_padded.1} parent=1 // pred_check
      _
    $region31: #{gcn_forward_padded.1} parent=1 // pred_check_branch
      %61 = sbr.rel (0) target = $region33
    $region32: #{gcn_forward_padded.1} parent=1 // pred_region
      %62 = dma.done [#allocation8], 1024
    $region33: #{gcn_forward_padded.1} parent=1 // pred_fallthru
      _
    // Predicated region
    $region34: #{gcn_forward_padded.1} parent=1 // pred_check
      _
    $region35: #{gcn_forward_padded.1} parent=1 // pred_check_branch
      %65 = sbr.rel target = $region37
    $region36: #{gcn_forward_padded.1} parent=1 // pred_region
      %66 = sst [smem:[#allocation13]] [#allocation12]
      %67 = sst [smem:[#allocation14]] [#allocation11]
    $region37: #{gcn_forward_padded.1} parent=1 // pred_fallthru
      _
    %69 = shalt.err (0)
    %s71 = sshll.u32 [#allocation2], 4
    %s72 = int_to_ptr.vmem [resolvable:$true] %s71
    %74 = dma.hbm_to_vmem [thread:$0]  %s1, 1024, %s72, [#allocation3]
    %v75 = vld [vmem:[#allocation4] sm:$0xf]
    %v76 = vld [vmem:[#allocation4 + $0x4] sm:$0xf]
    %v77 = vld [vmem:[#allocation4 + $0x8] sm:$0xf]
    %v78 = vld [vmem:[#allocation4 + $0xc] sm:$0xf]
    %v79 = vld [vmem:[#allocation4 + $0x10] sm:$0xf]
    %v80 = vld [vmem:[#allocation4 + $0x14] sm:$0xf]
    %v81 = vld [vmem:[#allocation4 + $0x18] sm:$0xf]
    %v82 = vld [vmem:[#allocation4 + $0x1c] sm:$0xf]
    %v83 = vld [vmem:[#allocation4 + $0x20] sm:$0xf]
    %v84 = vld [vmem:[#allocation4 + $0x24] sm:$0xf]
    %v85 = vld [vmem:[#allocation4 + $0x28] sm:$0xf]
    %v86 = vld [vmem:[#allocation4 + $0x2c] sm:$0xf]
    %v87 = vld [vmem:[#allocation4 + $0x30] sm:$0xf]
    %v88 = vld [vmem:[#allocation4 + $0x34] sm:$0xf]
    %v89 = vld [vmem:[#allocation4 + $0x38] sm:$0xf]
    %v90 = vld [vmem:[#allocation4 + $0x3c] sm:$0xf]
    %v91 = vld [vmem:[#allocation7] sm:$0xf]
    %v92 = vld [vmem:[#allocation7 + $0x4] sm:$0xf]
    %v93 = vld [vmem:[#allocation7 + $0x8] sm:$0xf]
    %v94 = vld [vmem:[#allocation7 + $0xc] sm:$0xf]
    %v95 = vld [vmem:[#allocation7 + $0x10] sm:$0xf]
    %v96 = vld [vmem:[#allocation7 + $0x14] sm:$0xf]
    %v97 = vld [vmem:[#allocation7 + $0x18] sm:$0xf]
    %v98 = vld [vmem:[#allocation7 + $0x1c] sm:$0xf]
    %v99 = vld [vmem:[#allocation7 + $0x20] sm:$0xf]
    %v100 = vld [vmem:[#allocation7 + $0x24] sm:$0xf]
    %v101 = vld [vmem:[#allocation7 + $0x28] sm:$0xf]
    %v102 = vld [vmem:[#allocation7 + $0x2c] sm:$0xf]
    %v103 = vld [vmem:[#allocation7 + $0x30] sm:$0xf]
    %v104 = vld [vmem:[#allocation7 + $0x34] sm:$0xf]
    %v105 = vld [vmem:[#allocation7 + $0x38] sm:$0xf]
    %v106 = vld [vmem:[#allocation7 + $0x3c] sm:$0xf]
    %v123 = vunpack.c.l.b16 %v75
    %v124 = vunpack.c.l.b16 %v76
    %v125 = vunpack.c.l.b16 %v77
    %v126 = vunpack.c.l.b16 %v78
    %v127 = vunpack.c.l.b16 %v79
    %v128 = vunpack.c.l.b16 %v80
    %v129 = vunpack.c.l.b16 %v81
    %v130 = vunpack.c.l.b16 %v82
    %v131 = vunpack.c.l.b16 %v83
    %v132 = vunpack.c.l.b16 %v84
    %v133 = vunpack.c.l.b16 %v85
    %v134 = vunpack.c.l.b16 %v86
    %v135 = vunpack.c.l.b16 %v87
    %v136 = vunpack.c.l.b16 %v88
    %v137 = vunpack.c.l.b16 %v89
    %v138 = vunpack.c.l.b16 %v90
    %v139 = vpack.c.b16 %v124, %v123
    %v140 = vpack.c.b16 %v126, %v125
    %v141 = vpack.c.b16 %v128, %v127
    %v142 = vpack.c.b16 %v130, %v129
    %v143 = vpack.c.b16 %v132, %v131
    %v144 = vpack.c.b16 %v134, %v133
    %v145 = vpack.c.b16 %v136, %v135
    %v146 = vpack.c.b16 %v138, %v137
    %v171 = vunpack.c.l.b16 %v91
    %v172 = vunpack.c.l.b16 %v92
    %v173 = vunpack.c.l.b16 %v93
    %v174 = vunpack.c.l.b16 %v94
    %v175 = vunpack.c.l.b16 %v95
    %v176 = vunpack.c.l.b16 %v96
    %v177 = vunpack.c.l.b16 %v97
    %v178 = vunpack.c.l.b16 %v98
    %v179 = vunpack.c.l.b16 %v99
    %v180 = vunpack.c.l.b16 %v100
    %v181 = vunpack.c.l.b16 %v101
    %v182 = vunpack.c.l.b16 %v102
    %v183 = vunpack.c.l.b16 %v103
    %v184 = vunpack.c.l.b16 %v104
    %v185 = vunpack.c.l.b16 %v105
    %v186 = vunpack.c.l.b16 %v106
    %v187 = vpack.c.b16 %v172, %v171
    %v188 = vpack.c.b16 %v174, %v173
    %v189 = vpack.c.b16 %v176, %v175
    %v190 = vpack.c.b16 %v178, %v177
    %v191 = vpack.c.b16 %v180, %v179
    %v192 = vpack.c.b16 %v182, %v181
    %v193 = vpack.c.b16 %v184, %v183
    %v194 = vpack.c.b16 %v186, %v185
    %203 = vmatprep.subr.bf16.mxu0 0
    %204 = vmatpush1.bf16.msra.mxu0 %v187
    %205 = vmatprep.subr.bf16.mxu0 0
    %206 = vmatpush1.bf16.msra.mxu0 %v188
    %207 = vmatprep.subr.bf16.mxu0 0
    %208 = vmatpush1.bf16.msra.mxu0 %v189
    %209 = vmatprep.subr.bf16.mxu0 0
    %210 = vmatpush1.bf16.msra.mxu0 %v190
    %211 = vmatprep.subr.bf16.mxu0 0
    %212 = vmatpush1.bf16.msra.mxu0 %v191
    %213 = vmatprep.subr.bf16.mxu0 0
    %214 = vmatpush1.bf16.msra.mxu0 %v192
    %215 = vmatprep.subr.bf16.mxu0 0
    %216 = vmatpush1.bf16.msra.mxu0 %v193
    %217 = vmatprep.subr.bf16.mxu0 0
    %218 = vmatpush1.bf16.msra.mxu0 %v194
    %219 = vmatprep.subr.bf16.mxu0 0
    %220 = vmatpush1.bf16.msra.mxu0 0
    %221 = vmatprep.subr.bf16.mxu0 0
    %222 = vmatpush1.bf16.msra.mxu0 0
    %223 = vmatprep.subr.bf16.mxu0 0
    %224 = vmatpush1.bf16.msra.mxu0 0
    %225 = vmatprep.subr.bf16.mxu0 0
    %226 = vmatpush1.bf16.msra.mxu0 0
    %227 = vmatprep.subr.bf16.mxu0 0
    %228 = vmatpush1.bf16.msra.mxu0 0
    %229 = vmatprep.subr.bf16.mxu0 0
    %230 = vmatpush1.bf16.msra.mxu0 0
    %231 = vmatprep.subr.bf16.mxu0 0
    %232 = vmatpush1.bf16.msra.mxu0 0
    %233 = vmatprep.subr.bf16.mxu0 0
    %234 = vmatpush1.bf16.msra.mxu0 0
    %235 = vmatprep.mubr.bf16.mxu0 0
    %236 = vmatmul.mubr.bf16.gmra.mrb[0].mxu0 %v139
    %v237 = vpop.f32.mrb[0].mxu0
    %v238 = vadd.f32 0.0, %v237
    %v239 = vpop.f32.mrb[0].mxu0
    %v240 = vpop.f32.mrb[0].mxu0
    %v241 = vadd.f32 0.0, %v240
    %v242 = vpop.f32.mrb[0].mxu0
    %243 = vmatprep.mubr.bf16.mxu0 0
    %244 = vmatmul.mubr.bf16.gmra.mrb[0].mxu0 %v140
    %v245 = vpop.f32.mrb[0].mxu0
    %v246 = vadd.f32 0.0, %v245
    %v247 = vpop.f32.mrb[0].mxu0
    %v248 = vpop.f32.mrb[0].mxu0
    %v249 = vadd.f32 0.0, %v248
    %v250 = vpop.f32.mrb[0].mxu0
    %251 = vmatprep.mubr.bf16.mxu0 0
    %252 = vmatmul.mubr.bf16.gmra.mrb[0].mxu0 %v141
    %v253 = vpop.f32.mrb[0].mxu0
    %v254 = vadd.f32 0.0, %v253
    %v255 = vpop.f32.mrb[0].mxu0
    %v256 = vpop.f32.mrb[0].mxu0
    %v257 = vadd.f32 0.0, %v256
    %v258 = vpop.f32.mrb[0].mxu0
    %259 = vmatprep.mubr.bf16.mxu0 0
    %260 = vmatmul.mubr.bf16.gmra.mrb[0].mxu0 %v142
    %v261 = vpop.f32.mrb[0].mxu0
    %v262 = vadd.f32 0.0, %v261
    %v263 = vpop.f32.mrb[0].mxu0
    %v264 = vpop.f32.mrb[0].mxu0
    %v265 = vadd.f32 0.0, %v264
    %v266 = vpop.f32.mrb[0].mxu0
    %267 = vmatprep.mubr.bf16.mxu0 0
    %268 = vmatmul.mubr.bf16.gmra.mrb[0].mxu0 %v143
    %v269 = vpop.f32.mrb[0].mxu0
    %v270 = vadd.f32 0.0, %v269
    %v271 = vpop.f32.mrb[0].mxu0
    %v272 = vpop.f32.mrb[0].mxu0
    %v273 = vadd.f32 0.0, %v272
    %v274 = vpop.f32.mrb[0].mxu0
    %275 = vmatprep.mubr.bf16.mxu0 0
    %276 = vmatmul.mubr.bf16.gmra.mrb[0].mxu0 %v144
    %v277 = vpop.f32.mrb[0].mxu0
    %v278 = vadd.f32 0.0, %v277
    %v279 = vpop.f32.mrb[0].mxu0
    %v280 = vpop.f32.mrb[0].mxu0
    %v281 = vadd.f32 0.0, %v280
    %v282 = vpop.f32.mrb[0].mxu0
    %283 = vmatprep.mubr.bf16.mxu0 0
    %284 = vmatmul.mubr.bf16.gmra.mrb[0].mxu0 %v145
    %v285 = vpop.f32.mrb[0].mxu0
    %v286 = vadd.f32 0.0, %v285
    %v287 = vpop.f32.mrb[0].mxu0
    %v288 = vpop.f32.mrb[0].mxu0
    %v289 = vadd.f32 0.0, %v288
    %v290 = vpop.f32.mrb[0].mxu0
    %291 = vmatprep.mubr.bf16.mxu0 0
    %292 = vmatmul.mubr.bf16.gmra.mrb[0].mxu0 %v146
    %v293 = vpop.f32.mrb[0].mxu0
    %v294 = vadd.f32 0.0, %v293
    %v295 = vpop.f32.mrb[0].mxu0
    %v296 = vpop.f32.mrb[0].mxu0
    %v297 = vadd.f32 0.0, %v296
    %v298 = vpop.f32.mrb[0].mxu0
    %299 = vdwg.mxu0
    %v300 = vpack.c.bf16 %v241, %v238
    %v301 = vpack.c.bf16 %v249, %v246
    %v302 = vpack.c.bf16 %v257, %v254
    %v303 = vpack.c.bf16 %v265, %v262
    %v304 = vpack.c.bf16 %v273, %v270
    %v305 = vpack.c.bf16 %v281, %v278
    %v306 = vpack.c.bf16 %v289, %v286
    %v307 = vpack.c.bf16 %v297, %v294
    %v308 = vld [vmem:[%s3] sm:$0x1]
    %v309 = vld [vmem:[#allocation9] sm:$0xf]
    %v310 = vld [vmem:[#allocation9 + $0x4] sm:$0xf]
    %v311 = vld [vmem:[#allocation9 + $0x8] sm:$0xf]
    %v312 = vld [vmem:[#allocation9 + $0xc] sm:$0xf]
    %v313 = vld [vmem:[#allocation9 + $0x10] sm:$0xf]
    %v314 = vld [vmem:[#allocation9 + $0x14] sm:$0xf]
    %v315 = vld [vmem:[#allocation9 + $0x18] sm:$0xf]
    %v316 = vld [vmem:[#allocation9 + $0x1c] sm:$0xf]
    %v317 = vld [vmem:[#allocation9 + $0x20] sm:$0xf]
    %v318 = vld [vmem:[#allocation9 + $0x24] sm:$0xf]
    %v319 = vld [vmem:[#allocation9 + $0x28] sm:$0xf]
    %v320 = vld [vmem:[#allocation9 + $0x2c] sm:$0xf]
    %v321 = vld [vmem:[#allocation9 + $0x30] sm:$0xf]
    %v322 = vld [vmem:[#allocation9 + $0x34] sm:$0xf]
    %v323 = vld [vmem:[#allocation9 + $0x38] sm:$0xf]
    %v324 = vld [vmem:[#allocation9 + $0x3c] sm:$0xf]
    %v325 = vld [vmem:[%s5] sm:$0x1]
    %s326 = smul.u32 4, 16
    %s327 = smul.u32 %s326, 1
    %s328 = sshll.u32 %s327, 4
    %329 = dma.done [#allocation3], %s328
    %v330 = vld [vmem:[#allocation2] sm:$0xff]
    %v331 = vld [vmem:[#allocation2 + $0x8] sm:$0xff]
    %v332 = vld [vmem:[#allocation2 + $0x10] sm:$0xff]
    %v333 = vld [vmem:[#allocation2 + $0x18] sm:$0xff]
    %v334 = vld [vmem:[#allocation2 + $0x20] sm:$0xff]
    %v335 = vld [vmem:[#allocation2 + $0x28] sm:$0xff]
    %v336 = vld [vmem:[#allocation2 + $0x30] sm:$0xff]
    %v337 = vld [vmem:[#allocation2 + $0x38] sm:$0xff]
    %v339 = vlaneseq
    %v340 = vshrl.u32 %v339, 7
    %v341 = vsub.s32 0, %v340
    %v342 = vrot.slane %v308, %v341
    %344 = vmatprep.subr.bf16.mxu0 0
    %345 = vmatpush1.bf16.msra.mxu0 %v300
    %346 = vmatprep.subr.bf16.mxu0 0
    %347 = vmatpush1.bf16.msra.mxu0 %v301
    %348 = vmatprep.subr.bf16.mxu0 0
    %349 = vmatpush1.bf16.msra.mxu0 %v302
    %350 = vmatprep.subr.bf16.mxu0 0
    %351 = vmatpush1.bf16.msra.mxu0 %v303
    %352 = vmatprep.subr.bf16.mxu0 0
    %353 = vmatpush1.bf16.msra.mxu0 %v304
    %354 = vmatprep.subr.bf16.mxu0 0
    %355 = vmatpush1.bf16.msra.mxu0 %v305
    %356 = vmatprep.subr.bf16.mxu0 0
    %357 = vmatpush1.bf16.msra.mxu0 %v306
    %358 = vmatprep.subr.bf16.mxu0 0
    %359 = vmatpush1.bf16.msra.mxu0 %v307
    %360 = vmatprep.subr.bf16.mxu0 0
    %361 = vmatpush1.bf16.msra.mxu0 0
    %362 = vmatprep.subr.bf16.mxu0 0
    %363 = vmatpush1.bf16.msra.mxu0 0
    %364 = vmatprep.subr.bf16.mxu0 0
    %365 = vmatpush1.bf16.msra.mxu0 0
    %366 = vmatprep.subr.bf16.mxu0 0
    %367 = vmatpush1.bf16.msra.mxu0 0
    %368 = vmatprep.subr.bf16.mxu0 0
    %369 = vmatpush1.bf16.msra.mxu0 0
    %370 = vmatprep.subr.bf16.mxu0 0
    %371 = vmatpush1.bf16.msra.mxu0 0
    %372 = vmatprep.subr.bf16.mxu0 0
    %373 = vmatpush1.bf16.msra.mxu0 0
    %374 = vmatprep.subr.bf16.mxu0 0
    %375 = vmatpush1.bf16.msra.mxu0 0
    %376 = vmatprep.mubr.bf16.mxu0 0
    %377 = vmatmul.mubr.bf16.gmra.mrb[0].mxu0 %v330
    %v378 = vpop.f32.mrb[0].mxu0
    %v379 = vadd.f32 %v342, %v378
    %v380 = vpop.f32.mrb[0].mxu0
    %v381 = vpop.f32.mrb[0].mxu0
    %v382 = vadd.f32 %v342, %v381
    %v383 = vpop.f32.mrb[0].mxu0
    %384 = vmatprep.mubr.bf16.mxu0 0
    %385 = vmatmul.mubr.bf16.gmra.mrb[0].mxu0 %v331
    %v386 = vpop.f32.mrb[0].mxu0
    %v387 = vadd.f32 %v342, %v386
    %v388 = vpop.f32.mrb[0].mxu0
    %v389 = vpop.f32.mrb[0].mxu0
    %v390 = vadd.f32 %v342, %v389
    %v391 = vpop.f32.mrb[0].mxu0
    %392 = vmatprep.mubr.bf16.mxu0 0
    %393 = vmatmul.mubr.bf16.gmra.mrb[0].mxu0 %v332
    %v394 = vpop.f32.mrb[0].mxu0
    %v395 = vadd.f32 %v342, %v394
    %v396 = vpop.f32.mrb[0].mxu0
    %v397 = vpop.f32.mrb[0].mxu0
    %v398 = vadd.f32 %v342, %v397
    %v399 = vpop.f32.mrb[0].mxu0
    %400 = vmatprep.mubr.bf16.mxu0 0
    %401 = vmatmul.mubr.bf16.gmra.mrb[0].mxu0 %v333
    %v402 = vpop.f32.mrb[0].mxu0
    %v403 = vadd.f32 %v342, %v402
    %v404 = vpop.f32.mrb[0].mxu0
    %v405 = vpop.f32.mrb[0].mxu0
    %v406 = vadd.f32 %v342, %v405
    %v407 = vpop.f32.mrb[0].mxu0
    %408 = vmatprep.mubr.bf16.mxu0 0
    %409 = vmatmul.mubr.bf16.gmra.mrb[0].mxu0 %v334
    %v410 = vpop.f32.mrb[0].mxu0
    %v411 = vadd.f32 %v342, %v410
    %v412 = vpop.f32.mrb[0].mxu0
    %v413 = vpop.f32.mrb[0].mxu0
    %v414 = vadd.f32 %v342, %v413
    %v415 = vpop.f32.mrb[0].mxu0
    %416 = vmatprep.mubr.bf16.mxu0 0
    %417 = vmatmul.mubr.bf16.gmra.mrb[0].mxu0 %v335
    %v418 = vpop.f32.mrb[0].mxu0
    %v419 = vadd.f32 %v342, %v418
    %v420 = vpop.f32.mrb[0].mxu0
    %v421 = vpop.f32.mrb[0].mxu0
    %v422 = vadd.f32 %v342, %v421
    %v423 = vpop.f32.mrb[0].mxu0
    %424 = vmatprep.mubr.bf16.mxu0 0
    %425 = vmatmul.mubr.bf16.gmra.mrb[0].mxu0 %v336
    %v426 = vpop.f32.mrb[0].mxu0
    %v427 = vadd.f32 %v342, %v426
    %v428 = vpop.f32.mrb[0].mxu0
    %v429 = vpop.f32.mrb[0].mxu0
    %v430 = vadd.f32 %v342, %v429
    %v431 = vpop.f32.mrb[0].mxu0
    %432 = vmatprep.mubr.bf16.mxu0 0
    %433 = vmatmul.mubr.bf16.gmra.mrb[0].mxu0 %v337
    %v434 = vpop.f32.mrb[0].mxu0
    %v435 = vadd.f32 %v342, %v434
    %v436 = vpop.f32.mrb[0].mxu0
    %v437 = vpop.f32.mrb[0].mxu0
    %v438 = vadd.f32 %v342, %v437
    %v439 = vpop.f32.mrb[0].mxu0
    %440 = vdwg.mxu0
    %v441 = vmax.f32 %v379, 0.0
    %v442 = vmax.f32 %v382, 0.0
    %v443 = vmax.f32 %v387, 0.0
    %v444 = vmax.f32 %v390, 0.0
    %v445 = vmax.f32 %v395, 0.0
    %v446 = vmax.f32 %v398, 0.0
    %v447 = vmax.f32 %v403, 0.0
    %v448 = vmax.f32 %v406, 0.0
    %v449 = vmax.f32 %v411, 0.0
    %v450 = vmax.f32 %v414, 0.0
    %v451 = vmax.f32 %v419, 0.0
    %v452 = vmax.f32 %v422, 0.0
    %v453 = vmax.f32 %v427, 0.0
    %v454 = vmax.f32 %v430, 0.0
    %v455 = vmax.f32 %v435, 0.0
    %v456 = vmax.f32 %v438, 0.0
    %v457 = vpack.c.bf16 %v442, %v441
    %v458 = vpack.c.bf16 %v444, %v443
    %v459 = vpack.c.bf16 %v446, %v445
    %v460 = vpack.c.bf16 %v448, %v447
    %v461 = vpack.c.bf16 %v450, %v449
    %v462 = vpack.c.bf16 %v452, %v451
    %v463 = vpack.c.bf16 %v454, %v453
    %v464 = vpack.c.bf16 %v456, %v455
    %v481 = vunpack.c.l.b16 %v309
    %v482 = vunpack.c.l.b16 %v310
    %v483 = vunpack.c.l.b16 %v311
    %v484 = vunpack.c.l.b16 %v312
    %v485 = vunpack.c.l.b16 %v313
    %v486 = vunpack.c.l.b16 %v314
    %v487 = vunpack.c.l.b16 %v315
    %v488 = vunpack.c.l.b16 %v316
    %v489 = vunpack.c.l.b16 %v317
    %v490 = vunpack.c.l.b16 %v318
    %v491 = vunpack.c.l.b16 %v319
    %v492 = vunpack.c.l.b16 %v320
    %v493 = vunpack.c.l.b16 %v321
    %v494 = vunpack.c.l.b16 %v322
    %v495 = vunpack.c.l.b16 %v323
    %v496 = vunpack.c.l.b16 %v324
    %v497 = vpack.c.b16 %v482, %v481
    %v498 = vpack.c.b16 %v484, %v483
    %v499 = vpack.c.b16 %v486, %v485
    %v500 = vpack.c.b16 %v488, %v487
    %v501 = vpack.c.b16 %v490, %v489
    %v502 = vpack.c.b16 %v492, %v491
    %v503 = vpack.c.b16 %v494, %v493
    %v504 = vpack.c.b16 %v496, %v495
    %513 = vmatprep.subr.bf16.mxu0 0
    %514 = vmatpush1.bf16.msra.mxu0 %v497
    %515 = vmatprep.subr.bf16.mxu0 0
    %516 = vmatpush1.bf16.msra.mxu0 %v498
    %517 = vmatprep.subr.bf16.mxu0 0
    %518 = vmatpush1.bf16.msra.mxu0 %v499
    %519 = vmatprep.subr.bf16.mxu0 0
    %520 = vmatpush1.bf16.msra.mxu0 %v500
    %521 = vmatprep.subr.bf16.mxu0 0
    %522 = vmatpush1.bf16.msra.mxu0 %v501
    %523 = vmatprep.subr.bf16.mxu0 0
    %524 = vmatpush1.bf16.msra.mxu0 %v502
    %525 = vmatprep.subr.bf16.mxu0 0
    %526 = vmatpush1.bf16.msra.mxu0 %v503
    %527 = vmatprep.subr.bf16.mxu0 0
    %528 = vmatpush1.bf16.msra.mxu0 %v504
    %529 = vmatprep.subr.bf16.mxu0 0
    %530 = vmatpush1.bf16.msra.mxu0 0
    %531 = vmatprep.subr.bf16.mxu0 0
    %532 = vmatpush1.bf16.msra.mxu0 0
    %533 = vmatprep.subr.bf16.mxu0 0
    %534 = vmatpush1.bf16.msra.mxu0 0
    %535 = vmatprep.subr.bf16.mxu0 0
    %536 = vmatpush1.bf16.msra.mxu0 0
    %537 = vmatprep.subr.bf16.mxu0 0
    %538 = vmatpush1.bf16.msra.mxu0 0
    %539 = vmatprep.subr.bf16.mxu0 0
    %540 = vmatpush1.bf16.msra.mxu0 0
    %541 = vmatprep.subr.bf16.mxu0 0
    %542 = vmatpush1.bf16.msra.mxu0 0
    %543 = vmatprep.subr.bf16.mxu0 0
    %544 = vmatpush1.bf16.msra.mxu0 0
    %545 = vmatprep.mubr.bf16.mxu0 0
    %546 = vmatmul.mubr.bf16.gmra.mrb[0].mxu0 %v457
    %v547 = vpop.f32.mrb[0].mxu0
    %v548 = vadd.f32 0.0, %v547
    %v549 = vpop.f32.mrb[0].mxu0
    %v550 = vpop.f32.mrb[0].mxu0
    %v551 = vadd.f32 0.0, %v550
    %v552 = vpop.f32.mrb[0].mxu0
    %553 = vmatprep.mubr.bf16.mxu0 0
    %554 = vmatmul.mubr.bf16.gmra.mrb[0].mxu0 %v458
    %v555 = vpop.f32.mrb[0].mxu0
    %v556 = vadd.f32 0.0, %v555
    %v557 = vpop.f32.mrb[0].mxu0
    %v558 = vpop.f32.mrb[0].mxu0
    %v559 = vadd.f32 0.0, %v558
    %v560 = vpop.f32.mrb[0].mxu0
    %561 = vmatprep.mubr.bf16.mxu0 0
    %562 = vmatmul.mubr.bf16.gmra.mrb[0].mxu0 %v459
    %v563 = vpop.f32.mrb[0].mxu0
    %v564 = vadd.f32 0.0, %v563
    %v565 = vpop.f32.mrb[0].mxu0
    %v566 = vpop.f32.mrb[0].mxu0
    %v567 = vadd.f32 0.0, %v566
    %v568 = vpop.f32.mrb[0].mxu0
    %569 = vmatprep.mubr.bf16.mxu0 0
    %570 = vmatmul.mubr.bf16.gmra.mrb[0].mxu0 %v460
    %v571 = vpop.f32.mrb[0].mxu0
    %v572 = vadd.f32 0.0, %v571
    %v573 = vpop.f32.mrb[0].mxu0
    %v574 = vpop.f32.mrb[0].mxu0
    %v575 = vadd.f32 0.0, %v574
    %v576 = vpop.f32.mrb[0].mxu0
    %577 = vmatprep.mubr.bf16.mxu0 0
    %578 = vmatmul.mubr.bf16.gmra.mrb[0].mxu0 %v461
    %v579 = vpop.f32.mrb[0].mxu0
    %v580 = vadd.f32 0.0, %v579
    %v581 = vpop.f32.mrb[0].mxu0
    %v582 = vpop.f32.mrb[0].mxu0
    %v583 = vadd.f32 0.0, %v582
    %v584 = vpop.f32.mrb[0].mxu0
    %585 = vmatprep.mubr.bf16.mxu0 0
    %586 = vmatmul.mubr.bf16.gmra.mrb[0].mxu0 %v462
    %v587 = vpop.f32.mrb[0].mxu0
    %v588 = vadd.f32 0.0, %v587
    %v589 = vpop.f32.mrb[0].mxu0
    %v590 = vpop.f32.mrb[0].mxu0
    %v591 = vadd.f32 0.0, %v590
    %v592 = vpop.f32.mrb[0].mxu0
    %593 = vmatprep.mubr.bf16.mxu0 0
    %594 = vmatmul.mubr.bf16.gmra.mrb[0].mxu0 %v463
    %v595 = vpop.f32.mrb[0].mxu0
    %v596 = vadd.f32 0.0, %v595
    %v597 = vpop.f32.mrb[0].mxu0
    %v598 = vpop.f32.mrb[0].mxu0
    %v599 = vadd.f32 0.0, %v598
    %v600 = vpop.f32.mrb[0].mxu0
    %601 = vmatprep.mubr.bf16.mxu0 0
    %602 = vmatmul.mubr.bf16.gmra.mrb[0].mxu0 %v464
    %v603 = vpop.f32.mrb[0].mxu0
    %v604 = vadd.f32 0.0, %v603
    %v605 = vpop.f32.mrb[0].mxu0
    %v606 = vpop.f32.mrb[0].mxu0
    %v607 = vadd.f32 0.0, %v606
    %v608 = vpop.f32.mrb[0].mxu0
    %609 = vdwg.mxu0
    %v610 = vpack.c.bf16 %v551, %v548
    %v611 = vpack.c.bf16 %v559, %v556
    %v612 = vpack.c.bf16 %v567, %v564
    %v613 = vpack.c.bf16 %v575, %v572
    %v614 = vpack.c.bf16 %v583, %v580
    %v615 = vpack.c.bf16 %v591, %v588
    %v616 = vpack.c.bf16 %v599, %v596
    %v617 = vpack.c.bf16 %v607, %v604
    %v619 = vlaneseq
    %v620 = vshrl.u32 %v619, 7
    %v621 = vsub.s32 0, %v620
    %v622 = vrot.slane %v325, %v621
    %624 = vmatprep.subr.bf16.mxu0 0
    %625 = vmatpush1.bf16.msra.mxu0 %v610
    %626 = vmatprep.subr.bf16.mxu0 0
    %627 = vmatpush1.bf16.msra.mxu0 %v611
    %628 = vmatprep.subr.bf16.mxu0 0
    %629 = vmatpush1.bf16.msra.mxu0 %v612
    %630 = vmatprep.subr.bf16.mxu0 0
    %631 = vmatpush1.bf16.msra.mxu0 %v613
    %632 = vmatprep.subr.bf16.mxu0 0
    %633 = vmatpush1.bf16.msra.mxu0 %v614
    %634 = vmatprep.subr.bf16.mxu0 0
    %635 = vmatpush1.bf16.msra.mxu0 %v615
    %636 = vmatprep.subr.bf16.mxu0 0
    %637 = vmatpush1.bf16.msra.mxu0 %v616
    %638 = vmatprep.subr.bf16.mxu0 0
    %639 = vmatpush1.bf16.msra.mxu0 %v617
    %640 = vmatprep.subr.bf16.mxu0 0
    %641 = vmatpush1.bf16.msra.mxu0 0
    %642 = vmatprep.subr.bf16.mxu0 0
    %643 = vmatpush1.bf16.msra.mxu0 0
    %644 = vmatprep.subr.bf16.mxu0 0
    %645 = vmatpush1.bf16.msra.mxu0 0
    %646 = vmatprep.subr.bf16.mxu0 0
    %647 = vmatpush1.bf16.msra.mxu0 0
    %648 = vmatprep.subr.bf16.mxu0 0
    %649 = vmatpush1.bf16.msra.mxu0 0
    %650 = vmatprep.subr.bf16.mxu0 0
    %651 = vmatpush1.bf16.msra.mxu0 0
    %652 = vmatprep.subr.bf16.mxu0 0
    %653 = vmatpush1.bf16.msra.mxu0 0
    %654 = vmatprep.subr.bf16.mxu0 0
    %655 = vmatpush1.bf16.msra.mxu0 0
    %656 = vmatprep.mubr.bf16.mxu0 0
    %657 = vmatmul.mubr.bf16.gmra.mrb[0].mxu0 %v330
    %v658 = vpop.f32.mrb[0].mxu0
    %v659 = vadd.f32 %v622, %v658
    %v660 = vpop.f32.mrb[0].mxu0
    %v661 = vpop.f32.mrb[0].mxu0
    %v662 = vadd.f32 %v622, %v661
    %v663 = vpop.f32.mrb[0].mxu0
    %664 = vmatprep.mubr.bf16.mxu0 0
    %665 = vmatmul.mubr.bf16.gmra.mrb[0].mxu0 %v331
    %v666 = vpop.f32.mrb[0].mxu0
    %v667 = vadd.f32 %v622, %v666
    %v668 = vpop.f32.mrb[0].mxu0
    %v669 = vpop.f32.mrb[0].mxu0
    %v670 = vadd.f32 %v622, %v669
    %v671 = vpop.f32.mrb[0].mxu0
    %672 = vmatprep.mubr.bf16.mxu0 0
    %673 = vmatmul.mubr.bf16.gmra.mrb[0].mxu0 %v332
    %v674 = vpop.f32.mrb[0].mxu0
    %v675 = vadd.f32 %v622, %v674
    %v676 = vpop.f32.mrb[0].mxu0
    %v677 = vpop.f32.mrb[0].mxu0
    %v678 = vadd.f32 %v622, %v677
    %v679 = vpop.f32.mrb[0].mxu0
    %680 = vmatprep.mubr.bf16.mxu0 0
    %681 = vmatmul.mubr.bf16.gmra.mrb[0].mxu0 %v333
    %v682 = vpop.f32.mrb[0].mxu0
    %v683 = vadd.f32 %v622, %v682
    %v684 = vpop.f32.mrb[0].mxu0
    %v685 = vpop.f32.mrb[0].mxu0
    %v686 = vadd.f32 %v622, %v685
    %v687 = vpop.f32.mrb[0].mxu0
    %688 = vmatprep.mubr.bf16.mxu0 0
    %689 = vmatmul.mubr.bf16.gmra.mrb[0].mxu0 %v334
    %v690 = vpop.f32.mrb[0].mxu0
    %v691 = vadd.f32 %v622, %v690
    %v692 = vpop.f32.mrb[0].mxu0
    %v693 = vpop.f32.mrb[0].mxu0
    %v694 = vadd.f32 %v622, %v693
    %v695 = vpop.f32.mrb[0].mxu0
    %696 = vmatprep.mubr.bf16.mxu0 0
    %697 = vmatmul.mubr.bf16.gmra.mrb[0].mxu0 %v335
    %v698 = vpop.f32.mrb[0].mxu0
    %v699 = vadd.f32 %v622, %v698
    %v700 = vpop.f32.mrb[0].mxu0
    %v701 = vpop.f32.mrb[0].mxu0
    %v702 = vadd.f32 %v622, %v701
    %v703 = vpop.f32.mrb[0].mxu0
    %704 = vmatprep.mubr.bf16.mxu0 0
    %705 = vmatmul.mubr.bf16.gmra.mrb[0].mxu0 %v336
    %v706 = vpop.f32.mrb[0].mxu0
    %v707 = vadd.f32 %v622, %v706
    %v708 = vpop.f32.mrb[0].mxu0
    %v709 = vpop.f32.mrb[0].mxu0
    %v710 = vadd.f32 %v622, %v709
    %v711 = vpop.f32.mrb[0].mxu0
    %712 = vmatprep.mubr.bf16.mxu0 0
    %713 = vmatmul.mubr.bf16.gmra.mrb[0].mxu0 %v337
    %v714 = vpop.f32.mrb[0].mxu0
    %v715 = vadd.f32 %v622, %v714
    %v716 = vpop.f32.mrb[0].mxu0
    %v717 = vpop.f32.mrb[0].mxu0
    %v718 = vadd.f32 %v622, %v717
    %v719 = vpop.f32.mrb[0].mxu0
    %720 = vdwg.mxu0
    %v721 = vlaneseq
    %v722 = vand.u32 %v721, 127
    %vm723 = vcmp.lt.s32.totalorder %v722, 8
    %v724 = vsel %vm723, %v659, -1e+30
    %v725 = vsel %vm723, %v662, -1e+30
    %v726 = vsel %vm723, %v667, -1e+30
    %v727 = vsel %vm723, %v670, -1e+30
    %v728 = vsel %vm723, %v675, -1e+30
    %v729 = vsel %vm723, %v678, -1e+30
    %v730 = vsel %vm723, %v683, -1e+30
    %v731 = vsel %vm723, %v686, -1e+30
    %v732 = vsel %vm723, %v691, -1e+30
    %v733 = vsel %vm723, %v694, -1e+30
    %v734 = vsel %vm723, %v699, -1e+30
    %v735 = vsel %vm723, %v702, -1e+30
    %v736 = vsel %vm723, %v707, -1e+30
    %v737 = vsel %vm723, %v710, -1e+30
    %v738 = vsel %vm723, %v715, -1e+30
    %v739 = vsel %vm723, %v718, -1e+30
    %740 = vmax.xlane.f32.xlu0 %v724
    %v741 = vpop.xlane.xlu0 %740
    %742 = vmax.xlane.f32.xlu0 %v725
    %v743 = vpop.xlane.xlu0 %742
    %744 = vmax.xlane.f32.xlu0 %v726
    %v745 = vpop.xlane.xlu0 %744
    %746 = vmax.xlane.f32.xlu0 %v727
    %v747 = vpop.xlane.xlu0 %746
    %748 = vmax.xlane.f32.xlu0 %v728
    %v749 = vpop.xlane.xlu0 %748
    %750 = vmax.xlane.f32.xlu0 %v729
    %v751 = vpop.xlane.xlu0 %750
    %752 = vmax.xlane.f32.xlu0 %v730
    %v753 = vpop.xlane.xlu0 %752
    %754 = vmax.xlane.f32.xlu0 %v731
    %v755 = vpop.xlane.xlu0 %754
    %756 = vmax.xlane.f32.xlu0 %v732
    %v757 = vpop.xlane.xlu0 %756
    %758 = vmax.xlane.f32.xlu0 %v733
    %v759 = vpop.xlane.xlu0 %758
    %760 = vmax.xlane.f32.xlu0 %v734
    %v761 = vpop.xlane.xlu0 %760
    %762 = vmax.xlane.f32.xlu0 %v735
    %v763 = vpop.xlane.xlu0 %762
    %764 = vmax.xlane.f32.xlu0 %v736
    %v765 = vpop.xlane.xlu0 %764
    %766 = vmax.xlane.f32.xlu0 %v737
    %v767 = vpop.xlane.xlu0 %766
    %768 = vmax.xlane.f32.xlu0 %v738
    %v769 = vpop.xlane.xlu0 %768
    %770 = vmax.xlane.f32.xlu0 %v739
    %v771 = vpop.xlane.xlu0 %770
    %v772 = vsub.f32 %v724, %v741
    %v773 = vsub.f32 %v725, %v743
    %v774 = vsub.f32 %v726, %v745
    %v775 = vsub.f32 %v727, %v747
    %v776 = vsub.f32 %v728, %v749
    %v777 = vsub.f32 %v729, %v751
    %v778 = vsub.f32 %v730, %v753
    %v779 = vsub.f32 %v731, %v755
    %v780 = vsub.f32 %v732, %v757
    %v781 = vsub.f32 %v733, %v759
    %v782 = vsub.f32 %v734, %v761
    %v783 = vsub.f32 %v735, %v763
    %v784 = vsub.f32 %v736, %v765
    %v785 = vsub.f32 %v737, %v767
    %v786 = vsub.f32 %v738, %v769
    %v787 = vsub.f32 %v739, %v771
    %v788 = vmul.f32 %v772, 1.442695
    %v789 = vpow.pop %v788
    %v790 = vmul.f32 %v773, 1.442695
    %v791 = vpow.pop %v790
    %v792 = vmul.f32 %v774, 1.442695
    %v793 = vpow.pop %v792
    %v794 = vmul.f32 %v775, 1.442695
    %v795 = vpow.pop %v794
    %v796 = vmul.f32 %v776, 1.442695
    %v797 = vpow.pop %v796
    %v798 = vmul.f32 %v777, 1.442695
    %v799 = vpow.pop %v798
    %v800 = vmul.f32 %v778, 1.442695
    %v801 = vpow.pop %v800
    %v802 = vmul.f32 %v779, 1.442695
    %v803 = vpow.pop %v802
    %v804 = vmul.f32 %v780, 1.442695
    %v805 = vpow.pop %v804
    %v806 = vmul.f32 %v781, 1.442695
    %v807 = vpow.pop %v806
    %v808 = vmul.f32 %v782, 1.442695
    %v809 = vpow.pop %v808
    %v810 = vmul.f32 %v783, 1.442695
    %v811 = vpow.pop %v810
    %v812 = vmul.f32 %v784, 1.442695
    %v813 = vpow.pop %v812
    %v814 = vmul.f32 %v785, 1.442695
    %v815 = vpow.pop %v814
    %v816 = vmul.f32 %v786, 1.442695
    %v817 = vpow.pop %v816
    %v818 = vmul.f32 %v787, 1.442695
    %v819 = vpow.pop %v818
    %820 = vadd.xlane.f32.xlu0 %v789
    %v821 = vpop.xlane.xlu0 %820
    %822 = vadd.xlane.f32.xlu0 %v791
    %v823 = vpop.xlane.xlu0 %822
    %824 = vadd.xlane.f32.xlu0 %v793
    %v825 = vpop.xlane.xlu0 %824
    %826 = vadd.xlane.f32.xlu0 %v795
    %v827 = vpop.xlane.xlu0 %826
    %828 = vadd.xlane.f32.xlu0 %v797
    %v829 = vpop.xlane.xlu0 %828
    %830 = vadd.xlane.f32.xlu0 %v799
    %v831 = vpop.xlane.xlu0 %830
    %832 = vadd.xlane.f32.xlu0 %v801
    %v833 = vpop.xlane.xlu0 %832
    %834 = vadd.xlane.f32.xlu0 %v803
    %v835 = vpop.xlane.xlu0 %834
    %836 = vadd.xlane.f32.xlu0 %v805
    %v837 = vpop.xlane.xlu0 %836
    %838 = vadd.xlane.f32.xlu0 %v807
    %v839 = vpop.xlane.xlu0 %838
    %840 = vadd.xlane.f32.xlu0 %v809
    %v841 = vpop.xlane.xlu0 %840
    %842 = vadd.xlane.f32.xlu0 %v811
    %v843 = vpop.xlane.xlu0 %842
    %844 = vadd.xlane.f32.xlu0 %v813
    %v845 = vpop.xlane.xlu0 %844
    %846 = vadd.xlane.f32.xlu0 %v815
    %v847 = vpop.xlane.xlu0 %846
    %848 = vadd.xlane.f32.xlu0 %v817
    %v849 = vpop.xlane.xlu0 %848
    %850 = vadd.xlane.f32.xlu0 %v819
    %v851 = vpop.xlane.xlu0 %850
    %v852 = vlog2.pop %v821
    %v853 = vmul.f32 %v852, 0.6931472
    %v854 = vlog2.pop %v823
    %v855 = vmul.f32 %v854, 0.6931472
    %v856 = vlog2.pop %v825
    %v857 = vmul.f32 %v856, 0.6931472
    %v858 = vlog2.pop %v827
    %v859 = vmul.f32 %v858, 0.6931472
    %v860 = vlog2.pop %v829
    %v861 = vmul.f32 %v860, 0.6931472
    %v862 = vlog2.pop %v831
    %v863 = vmul.f32 %v862, 0.6931472
    %v864 = vlog2.pop %v833
    %v865 = vmul.f32 %v864, 0.6931472
    %v866 = vlog2.pop %v835
    %v867 = vmul.f32 %v866, 0.6931472
    %v868 = vlog2.pop %v837
    %v869 = vmul.f32 %v868, 0.6931472
    %v870 = vlog2.pop %v839
    %v871 = vmul.f32 %v870, 0.6931472
    %v872 = vlog2.pop %v841
    %v873 = vmul.f32 %v872, 0.6931472
    %v874 = vlog2.pop %v843
    %v875 = vmul.f32 %v874, 0.6931472
    %v876 = vlog2.pop %v845
    %v877 = vmul.f32 %v876, 0.6931472
    %v878 = vlog2.pop %v847
    %v879 = vmul.f32 %v878, 0.6931472
    %v880 = vlog2.pop %v849
    %v881 = vmul.f32 %v880, 0.6931472
    %v882 = vlog2.pop %v851
    %v883 = vmul.f32 %v882, 0.6931472
    %v884 = vsub.f32 %v772, %v853
    %v885 = vsub.f32 %v773, %v855
    %v886 = vsub.f32 %v774, %v857
    %v887 = vsub.f32 %v775, %v859
    %v888 = vsub.f32 %v776, %v861
    %v889 = vsub.f32 %v777, %v863
    %v890 = vsub.f32 %v778, %v865
    %v891 = vsub.f32 %v779, %v867
    %v892 = vsub.f32 %v780, %v869
    %v893 = vsub.f32 %v781, %v871
    %v894 = vsub.f32 %v782, %v873
    %v895 = vsub.f32 %v783, %v875
    %v896 = vsub.f32 %v784, %v877
    %v897 = vsub.f32 %v785, %v879
    %v898 = vsub.f32 %v786, %v881
    %v899 = vsub.f32 %v787, %v883
    %900 = vst [vmem:[#allocation10] sm:$0xff] %v884
    %901 = vst [vmem:[#allocation10 + $0x8] sm:$0xff] %v885
    %902 = vst [vmem:[#allocation10 + $0x10] sm:$0xff] %v886
    %903 = vst [vmem:[#allocation10 + $0x18] sm:$0xff] %v887
    %904 = vst [vmem:[#allocation10 + $0x20] sm:$0xff] %v888
    %905 = vst [vmem:[#allocation10 + $0x28] sm:$0xff] %v889
    %906 = vst [vmem:[#allocation10 + $0x30] sm:$0xff] %v890
    %907 = vst [vmem:[#allocation10 + $0x38] sm:$0xff] %v891
    %908 = vst [vmem:[#allocation10 + $0x40] sm:$0xff] %v892
    %909 = vst [vmem:[#allocation10 + $0x48] sm:$0xff] %v893
    %910 = vst [vmem:[#allocation10 + $0x50] sm:$0xff] %v894
    %911 = vst [vmem:[#allocation10 + $0x58] sm:$0xff] %v895
    %912 = vst [vmem:[#allocation10 + $0x60] sm:$0xff] %v896
    %913 = vst [vmem:[#allocation10 + $0x68] sm:$0xff] %v897
    %914 = vst [vmem:[#allocation10 + $0x70] sm:$0xff] %v898
    %915 = vst [vmem:[#allocation10 + $0x78] sm:$0xff] %v899
    // Predicated region
    $region38: #{gcn_forward_padded.1} parent=1 // pred_check
      _
    $region39: #{gcn_forward_padded.1} parent=1 // pred_check_branch
      %917 = sbr.rel (0) target = $region41
    $region40: #{gcn_forward_padded.1} parent=1 // pred_region
      %s919 = ssub.s32 2048, 2048
      %920 = vsyncadd [#allocation6], %s919
      %s921 = sshll.u32 [#allocation10], 4
      %s922 = int_to_ptr.vmem [resolvable:$true] %s921
      %927 = dma.vmem_to_hbm [thread:$0]  %s922, 2048, %s6, [#allocation6], 128, 128, 8
    $region41: #{gcn_forward_padded.1} parent=1 // pred_fallthru
      _
    // Predicated region
    $region42: #{gcn_forward_padded.1} parent=1 // pred_check
      _
    $region43: #{gcn_forward_padded.1} parent=1 // pred_check_branch
      %929 = sbr.rel (0) target = $region45
    $region44: #{gcn_forward_padded.1} parent=1 // pred_region
      %930 = dma.done [#allocation6], 2048
    $region45: #{gcn_forward_padded.1} parent=1 // pred_fallthru
      _
    %931 = vsyncpa [#allocation5], 1
    %932 = vsyncpa [#allocation8], 1
    %933 = vsyncpa [#allocation6], 1
  %934 = vsyncmov [#allocation3]
  %s935 = vpop.sfrf %934
  %p936 = scmp.eq.s32.totalorder %s935, 0
  %p937 = pneg %p936
  %939 = shalt.err (%p937)

</llo_original>
